<compile_context>
chip_gen: v7x
topology: tpu7x:2x2x1
jax: 0.10.0
libtpu: 0.0.40
codegen_flags: <defaults>
</compile_context>

<pallas_src>
import functools

import jax
import jax.numpy as jnp
from jax.experimental import pallas as pl
from jax.experimental.pallas import tpu as pltpu


def _round_up(x, m):
    return (x + m - 1) // m * m


# ----------------------------- Pallas kernel --------------------------------
def _rbf_cov_kernel(logs2_ref, sig2_ref, x1a_ref, x2ta_ref, k_ref, *,
                    tm, tn, add_noise, gate_diag):
    """One (tm, tn) tile of K = exp(min(t, log scale^2)) (+ sigma_n^2 on diag).

    The exponent t = x1.x2 - 0.5||x1||^2 - 0.5||x2||^2 + log(scale^2) comes
    entirely from the MXU: row norms and log(scale^2) are folded into two
    extra contraction rows/columns of the augmented inputs (D -> D+2).
    """
    i = pl.program_id(0)
    j = pl.program_id(1)

    t = jnp.dot(x1a_ref[...], x2ta_ref[...],
                preferred_element_type=jnp.float32)              # (tm, tn)
    # Clamp: mathematically -0.5*||x1-x2||^2 <= 0, so t <= log(scale^2).
    k = jnp.exp(jnp.minimum(t, logs2_ref[0, 0]))                 # (tm, tn)

    if not add_noise:
        k_ref[...] = k
    elif gate_diag:
        # Square tiles (tm == tn): the global diagonal only touches i == j
        # tiles; each tile is stored exactly once (no read-modify-write).
        @pl.when(i == j)
        def _():
            row = jax.lax.broadcasted_iota(jnp.int32, (tm, tn), 0)
            col = jax.lax.broadcasted_iota(jnp.int32, (tm, tn), 1)
            k_ref[...] = k + jnp.where(row == col, sig2_ref[0, 0],
                                       jnp.float32(0.0))

        @pl.when(i != j)
        def _():
            k_ref[...] = k
    else:
        # Row-strip tiles: every strip crosses the global diagonal; fuse the
        # masked add into the single store.
        row = jax.lax.broadcasted_iota(jnp.int32, (tm, tn), 0) + i * tm
        col = jax.lax.broadcasted_iota(jnp.int32, (tm, tn), 1) + j * tn
        k_ref[...] = k + jnp.where(row == col, sig2_ref[0, 0],
                                   jnp.float32(0.0))


# ----------------------------- wrapper ---------------------------------------
def rbf_covariance(x1, x2, scale2, sigma_n_2, *, add_noise,
                   strip_max_cols=4096, tile=1024):
    """K(X1, X2) = scale^2 * exp(-0.5||x1-x2||^2) (+ sigma_n^2 I if add_noise),
    computed with a Pallas TPU kernel.

    - n2 (padded to 128) <= strip_max_cols: lane-dense row-strip tiles
      (tm, n2p), >= 2 grid steps whenever possible (pipelined writeback,
      v7x megacore).
    - larger N: square `tile` x `tile` tiles (default 1024; keep <= 1024 so the
      double-buffered output block stays well under v7x's VMEM budget).
    Inputs are zero-padded to tile multiples and the result is sliced back.
    """
    x1 = jnp.asarray(x1, jnp.float32)
    x2 = jnp.asarray(x2, jnp.float32)
    n1, d = x1.shape
    n2, d2 = x2.shape
    assert d == d2, "feature dims must match"
    if add_noise:
        # Diagonal noise only makes sense for K(X, X) (torch adds eye(N1)).
        assert n1 == n2, "diagonal noise requires a square covariance"

    n2_128 = _round_up(n2, 128)
    if n2_128 <= strip_max_cols:
        # Row-strip tiling.
        tn = n2_128
        if n1 <= 16:
            tm = _round_up(n1, 8)                 # single tiny strip
        elif n1 <= 512:
            tm = _round_up(-(-n1 // 2), 8)        # two strips -> both v7x TCs
        else:
            tm = 256                              # 256-row strips
        gate_diag = False
    else:
        # Large-N square-tile path.
        tm = tn = tile
        gate_diag = True

    n1p = _round_up(n1, tm)
    n2p = _round_up(n2, tn)

    x1p = x1 if n1p == n1 else jnp.pad(x1, ((0, n1p - n1), (0, 0)))
    x2p = x2 if n2p == n2 else jnp.pad(x2, ((0, n2p - n2), (0, 0)))

    # Fold the row norms and log(scale^2) into the contraction (D -> D+2):
    #   x1_aug = [x1, -0.5*||x1||^2, 1]
    #   x2_aug = [x2, 1, -0.5*||x2||^2 + log(scale^2)]   (then transposed)
    logs2 = jnp.log(jnp.asarray(scale2, jnp.float32))
    sq1 = jnp.sum(x1p * x1p, axis=1, keepdims=True)               # (n1p, 1)
    sq2 = jnp.sum(x2p * x2p, axis=1, keepdims=True)               # (n2p, 1)
    x1a = jnp.concatenate(
        [x1p, -0.5 * sq1, jnp.ones((n1p, 1), jnp.float32)], axis=1)   # (n1p, d+2)
    x2ta = jnp.concatenate(
        [x2p, jnp.ones((n2p, 1), jnp.float32), -0.5 * sq2 + logs2],
        axis=1).T                                                      # (d+2, n2p)
    daug = d + 2

    kernel = functools.partial(_rbf_cov_kernel, tm=tm, tn=tn,
                               add_noise=add_noise, gate_diag=gate_diag)
    logs2_arr = logs2.reshape(1, 1)
    sig2_arr = jnp.asarray(sigma_n_2, jnp.float32).reshape(1, 1)

    k = pl.pallas_call(
        kernel,
        out_shape=jax.ShapeDtypeStruct((n1p, n2p), jnp.float32),
        grid_spec=pltpu.PrefetchScalarGridSpec(
            num_scalar_prefetch=0,
            grid=(n1p // tm, n2p // tn),
            in_specs=[
                pl.BlockSpec(memory_space=pltpu.SMEM),             # log(scale^2)
                pl.BlockSpec(memory_space=pltpu.SMEM),             # sigma_n^2
                pl.BlockSpec((tm, daug), lambda i, j: (i, 0)),     # augmented X1
                pl.BlockSpec((daug, tn), lambda i, j: (0, j)),     # augmented X2^T
            ],
            out_specs=pl.BlockSpec((tm, tn), lambda i, j: (i, j)),
        ),
        compiler_params=pltpu.CompilerParams(
            dimension_semantics=("parallel", "parallel")
        ),
    )(logs2_arr, sig2_arr, x1a, x2ta)

    if (n1p, n2p) != (n1, n2):
        k = k[:n1, :n2]
    return k


# ----------------------------- GP_prior module ------------------------------
class GPPrior:
    """JAX port of gpr_lib GP_prior with a concrete RBF covariance (hot path in Pallas)."""

    def __init__(self, active_dims, sigma_n_init=0.1, scale_init=1.0, sigma_n_num=0.0):
        # Deterministic parameter initialization (mirrors nn.Parameter(log(init))).
        self.active_dims = jnp.asarray(active_dims, jnp.int32)
        self.sigma_n_log = jnp.log(jnp.float32(sigma_n_init))
        self.scale_log = jnp.log(jnp.float32(scale_init))
        self.sigma_n_num = jnp.float32(sigma_n_num)
        self.GP_with_noise = True
        self.flg_mean = False  # f_mean=None in __init__

    def get_sigma_n_2(self):
        return jnp.exp(self.sigma_n_log) ** 2 + self.sigma_n_num ** 2

    def get_mean(self, X):
        # flg_mean is False -> PyTorch module returns the scalar 0.0
        return jnp.float32(0.0)

    def get_covariance(self, X1, X2=None, flg_noise=False):
        if X2 is None:
            X2 = X1
        X1a = X1[:, self.active_dims]
        X2a = X2[:, self.active_dims]
        scale2 = jnp.exp(self.scale_log) ** 2
        add_noise = bool(flg_noise and self.GP_with_noise)
        sig2 = self.get_sigma_n_2() if add_noise else jnp.float32(0.0)
        return rbf_covariance(X1a, X2a, scale2, sig2, add_noise=add_noise)

    def forward(self, X):
        K_X = self.get_covariance(X, flg_noise=self.GP_with_noise)
        # TODO(synk): dense Cholesky / cholesky_inverse has no clean Pallas TPU
        # equivalent; done in plain JAX (XLA) below.  PyTorch runs this in f64;
        # here fp32 relies on the sigma_n^2 diagonal to keep K well-conditioned.
        L = jnp.linalg.cholesky(K_X)
        log_det = 2.0 * jnp.sum(jnp.log(jnp.diag(L)))
        eye = jnp.eye(K_X.shape[0], dtype=K_X.dtype)
        K_X_inv = jax.scipy.linalg.cho_solve((L, True), eye)  # == torch.cholesky_inverse(L)
        m_X = self.get_mean(X)
        return m_X, K_X, K_X_inv, log_det


# --------------------------------- main --------------------------------------
if __name__ == "__main__":
    key = jax.random.PRNGKey(0)
    N, D = 256, 8  # [num_samples, num_features]
    X = jax.random.normal(key, (N, D), dtype=jnp.float32)

    gp = GPPrior(active_dims=list(range(D)), sigma_n_init=0.1, scale_init=1.0,
                 sigma_n_num=0.0)

    m_X, K_X, K_X_inv, log_det = gp.forward(X)
    jax.block_until_ready((K_X, K_X_inv, log_det))

    # Reference check of the Pallas-computed covariance against plain JAX.
    sqd = jnp.sum((X[:, None, :] - X[None, :, :]) ** 2, axis=-1)
    K_ref = jnp.exp(gp.scale_log) ** 2 * jnp.exp(-0.5 * sqd) \
        + gp.get_sigma_n_2() * jnp.eye(N, dtype=jnp.float32)
    assert jnp.allclose(K_X, K_ref, atol=1e-4, rtol=1e-4), "covariance mismatch"
    # Sanity: K_X_inv @ K_X ~ I, log_det finite.
    assert jnp.allclose(K_X_inv @ K_X, jnp.eye(N), atol=1e-2)
    assert jnp.isfinite(log_det)

    # Exercise the large-N square-tile path (gated diagonal, padding + slicing)
    # by forcing small thresholds: N=300 with 128x128 tiles -> grid (3, 3).
    Xs = jax.random.normal(jax.random.PRNGKey(1), (300, D), dtype=jnp.float32)
    K_t = rbf_covariance(Xs, Xs, jnp.float32(1.0), jnp.float32(0.01),
                         add_noise=True, strip_max_cols=128, tile=128)
    jax.block_until_ready(K_t)
    sqd_t = jnp.sum((Xs[:, None, :] - Xs[None, :, :]) ** 2, axis=-1)
    K_t_ref = jnp.exp(-0.5 * sqd_t) + 0.01 * jnp.eye(300, dtype=jnp.float32)
    assert jnp.allclose(K_t, K_t_ref, atol=1e-4, rtol=1e-4), "tiled covariance mismatch"

    # Exercise the rectangular / no-noise strip path (cross-covariance).
    Xa, Xb = X[:64], Xs[:200]
    K_c = rbf_covariance(Xa, Xb, jnp.float32(1.0), jnp.float32(0.0), add_noise=False)
    jax.block_until_ready(K_c)
    sqd_c = jnp.sum((Xa[:, None, :] - Xb[None, :, :]) ** 2, axis=-1)
    K_c_ref = jnp.exp(-0.5 * sqd_c)
    assert jnp.allclose(K_c, K_c_ref, atol=1e-4, rtol=1e-4), "cross covariance mismatch"

    print("KERNEL_OK")
</pallas_src>

<mosaic_0001>
module attributes {stable_mosaic.version = 11 : i64} {
  func.func @_rbf_cov_kernel(%arg0: i32, %arg1: i32, %arg2: memref<1x1xf32, #tpu.memory_space<smem>>, %arg3: memref<1x1xf32, #tpu.memory_space<smem>>, %arg4: memref<128x10xf32, #tpu.memory_space<vmem>>, %arg5: memref<10x256xf32, #tpu.memory_space<vmem>>, %arg6: memref<128x256xf32, #tpu.memory_space<vmem>>) attributes {dimension_semantics = [#tpu.dimension_semantics<parallel>, #tpu.dimension_semantics<parallel>], iteration_bounds = array<i64: 2, 1>, scalar_prefetch = 0 : i64, scratch_operands = 0 : i64, tpu.core_type = #tpu.core_type<tc>, window_params = [{transform_indices = @transform_0, window_bounds = array<i64: 1, 1>}, {transform_indices = @transform_1, window_bounds = array<i64: 1, 1>}, {transform_indices = @transform_2, window_bounds = array<i64: 128, 10>}, {transform_indices = @transform_3, window_bounds = array<i64: 10, 256>}, {transform_indices = @transform_4, window_bounds = array<i64: 128, 256>}]} {
    %c0 = arith.constant 0 : index
    %c0_0 = arith.constant 0 : index
    %0 = vector.load %arg4[%c0, %c0_0] : memref<128x10xf32, #tpu.memory_space<vmem>>, vector<128x10xf32>
    %c0_1 = arith.constant 0 : index
    %c0_2 = arith.constant 0 : index
    %1 = vector.load %arg5[%c0_1, %c0_2] : memref<10x256xf32, #tpu.memory_space<vmem>>, vector<10x256xf32>
    %cst = arith.constant dense<0.000000e+00> : vector<128x256xf32>
    %2 = tpu.matmul %0, %1, %cst {dimension_numbers = #tpu.dot_dimension_numbers<[1], [0], [0], [1], [0, 0, 1, 1], [], []>} : vector<128x10xf32>, vector<10x256xf32>, vector<128x256xf32> -> vector<128x256xf32>
    %c0_3 = arith.constant 0 : index
    %c0_4 = arith.constant 0 : index
    %3 = memref.load %arg2[%c0_3, %c0_4] : memref<1x1xf32, #tpu.memory_space<smem>>
    %4 = vector.broadcast %3 : f32 to vector<128x256xf32>
    %5 = arith.minimumf %2, %4 : vector<128x256xf32>
    %6 = math.exp %5 : vector<128x256xf32>
    %7 = tpu.iota {dimensions = array<i32: 0>} : vector<128x256xi32>
    %c128_i32 = arith.constant 128 : i32
    %8 = arith.muli %arg0, %c128_i32 : i32
    %9 = vector.broadcast %8 : i32 to vector<128x256xi32>
    %10 = arith.addi %7, %9 : vector<128x256xi32>
    %11 = tpu.iota {dimensions = array<i32: 1>} : vector<128x256xi32>
    %c256_i32 = arith.constant 256 : i32
    %12 = arith.muli %arg1, %c256_i32 : i32
    %13 = vector.broadcast %12 : i32 to vector<128x256xi32>
    %14 = arith.addi %11, %13 : vector<128x256xi32>
    %15 = arith.cmpi eq, %10, %14 : vector<128x256xi32>
    %c0_5 = arith.constant 0 : index
    %c0_6 = arith.constant 0 : index
    %16 = memref.load %arg3[%c0_5, %c0_6] : memref<1x1xf32, #tpu.memory_space<smem>>
    %cst_7 = arith.constant 0.000000e+00 : f32
    %17 = vector.broadcast %16 : f32 to vector<128x256xf32>
    %18 = vector.broadcast %cst_7 : f32 to vector<128x256xf32>
    %19 = arith.select %15, %17, %18 : vector<128x256xi1>, vector<128x256xf32>
    %20 = arith.addf %6, %19 : vector<128x256xf32>
    %c0_8 = arith.constant 0 : index
    %c0_9 = arith.constant 0 : index
    %21 = vector.load %arg6[%c0_8, %c0_9] : memref<128x256xf32, #tpu.memory_space<vmem>>, vector<128x256xf32>
    tpu.vector_store %arg6[%c0_8, %c0_9], %20 {strides = array<i32>} : memref<128x256xf32, #tpu.memory_space<vmem>>, vector<128x256xf32>,
    return
  }
  func.func @transform_0(%arg0: i32, %arg1: i32) -> (i32, i32) {
    %c0_i32 = arith.constant 0 : i32
    %c0_i32_0 = arith.constant 0 : i32
    %c0_i32_1 = arith.constant 0 : i32
    return %c0_i32, %c0_i32_0 : i32, i32
  }
  func.func @transform_1(%arg0: i32, %arg1: i32) -> (i32, i32) {
    %c0_i32 = arith.constant 0 : i32
    %c0_i32_0 = arith.constant 0 : i32
    %c0_i32_1 = arith.constant 0 : i32
    return %c0_i32, %c0_i32_0 : i32, i32
  }
  func.func @transform_2(%arg0: i32, %arg1: i32) -> (i32, i32) {
    %c0_i32 = arith.constant 0 : i32
    %c0_i32_0 = arith.constant 0 : i32
    return %arg0, %c0_i32 : i32, i32
  }
  func.func @transform_3(%arg0: i32, %arg1: i32) -> (i32, i32) {
    %c0_i32 = arith.constant 0 : i32
    %c0_i32_0 = arith.constant 0 : i32
    return %c0_i32, %arg1 : i32, i32
  }
  func.func @transform_4(%arg0: i32, %arg1: i32) -> (i32, i32) {
    %c0_i32 = arith.constant 0 : i32
    return %arg0, %arg1 : i32, i32
  }
}

</mosaic_0001>

<llo_original>
// kernel: tpu_custom_call.1
$region0: #{tpu_custom_call.1}
  #allocation0 [shape = 'u32[]', space=smem, size = 0x4, offset = 0x4, fixed_abs, tag = 'smem constant byte address 0x4 - core index']
  #allocation1 [shape = 'u32[144,128]{1,0:T(1,128)}', space=vmem, size = 0x12000, scoped, tag = 'internal scratch']
  #allocation2 [shape = 'f32[1,1]{1,0:T(1,128)S(6)}', space=smem, size = 0x200, scoped, tag = 'scoped memory for tpu_custom_call.1']
  #allocation3 [shape = 'f32[1,1]{1,0:T(1,128)S(6)}', space=smem, size = 0x200, scoped, tag = 'scoped memory for tpu_custom_call.1']
  %s0 = inlined_call_operand.<no memory space> [shape: f32[1,1], index: 0, kind: input, shape index: {}]
  %s1 = inlined_call_operand.<no memory space> [shape: f32[1,1], index: 1, kind: input, shape index: {}]
  %s2 = inlined_call_operand.vmem [shape: f32[256,10], index: 2, kind: input, shape index: {}]
  %s3 = inlined_call_operand.vmem [shape: f32[10,256], index: 3, kind: input, shape index: {}]
  %s4 = inlined_call_operand.hbm [shape: f32[256,256], index: 4, kind: output, shape index: {}]
  %s5 = sld [smem:[#allocation0]]
  $region49: #{tpu_custom_call.1} parent=0
    _
  %s7 = ssub.s32 1, %s5
  %s8 = scalar_select 0, %s7, %s5
  %9 = sst [smem:[#allocation2]] %s0
  %10 = sst [smem:[#allocation3]] %s1
  $region1: #{tpu_custom_call.1} parent=0
    #allocation4 [shape = 'u8[262144]{0}', space=vmem, size = 0x40000, scoped, tag = 'output window, operand 0']
    #allocation5 [shape = 's32[2]{0}', space=sflag, size = 0x8, scoped, tag = 'scoped memory for tpu_custom_call.1']
    %11 = vsyncpa [#allocation5], 0
    %s12 = scalar_lea.sflag [#allocation5], 1
    %13 = vsyncpa %s12, 0
    loop: start=0, step=1, limit=4
    $region2: #{tpu_custom_call.1} parent=1 // loop_pre_header
      _
    $region3: #{tpu_custom_call.1} parent=1 // loop_header
      %s15 = sphi 0, %s19
      %p16 = scmp.ge.s32.totalorder %s15, 4
      %s22 = sphi 0, %s34
      %s23 = sphi 0, %s30
      %s24 = sphi 0, %s22
      %s25 = sphi 0, %s23
      %s26 = sphi 0, %s24
      %s27 = sphi 0, %s25
      %s35 = sphi 0, %s35
      %s37 = sphi 0, %s35
      %s38 = sphi 0, %s37
      %s52 = sphi 0, %s38
      %s56 = sphi 0, %s56
      %s58 = sphi 0, %s56
      %s59 = sphi 0, %s58
      %s73 = sphi 0, %s59
      %s79 = sphi 0, %s81
      %s82 = sphi 0, %s79
      %s83 = sphi 0, %s82
      %s99 = sphi 0, %s83
      %s105 = sphi 0, %s107
      %s108 = sphi 0, %s105
      %s109 = sphi 0, %s108
      %s125 = sphi 0, %s109
      %s133 = sphi 0, %s135
      %s136 = sphi 0, %s133
      %s137 = sphi 0, %s136
      %s153 = sphi 0, %s137
    $region4: #{tpu_custom_call.1} parent=1 // loop_header_branch
      %18 = sbr.rel (%p16) target = $region8
    $region5: #{tpu_custom_call.1} parent=1 // loop_body
      %s20 = ssub.s32 %s15, 1
      %s21 = ssub.s32 %s15, 2
      %s28 = sadd.s32 1, %s23
      %p29 = scmp.ge.s32.totalorder %s28, 1
      %s30 = scalar_select %p29, 0, %s28
      %s31 = sadd.s32 1, %s22
      %s32 = scalar_select %p29, %s31, %s22
      %p33 = scmp.ge.s32.totalorder %s32, 2
      %s34 = scalar_select %p33, 0, %s32
      %s36 = sadd.s32 %s35, 1
      %p39 = scmp.eq.s32.totalorder %s15, 1
      %p40 = scmp.ne.s32.totalorder %s35, %s37
      %p41 = scmp.eq.s32.totalorder %s15, 0
      %p42 = por %p40, %p41
      %p43 = scmp.ne.s32.totalorder %s35, %s37
      %p44 = scmp.eq.s32.totalorder %s20, 1
      %p45 = por %p43, %p44
      %p46 = scmp.ne.s32.totalorder %s37, %s38
      %p47 = scmp.eq.s32.totalorder %s20, 0
      %p48 = por %p46, %p47
      %p49 = scmp.ne.s32.totalorder %s37, %s38
      %p50 = scmp.eq.s32.totalorder %s21, 1
      %p51 = por %p49, %p50
      %p53 = scmp.ne.s32.totalorder %s38, %s52
      %p54 = scmp.eq.s32.totalorder %s21, 0
      %p55 = por %p53, %p54
      %s57 = sadd.s32 %s56, 1
      %p60 = scmp.eq.s32.totalorder %s15, 1
      %p61 = scmp.ne.s32.totalorder %s56, %s58
      %p62 = scmp.eq.s32.totalorder %s15, 0
      %p63 = por %p61, %p62
      %p64 = scmp.ne.s32.totalorder %s56, %s58
      %p65 = scmp.eq.s32.totalorder %s20, 1
      %p66 = por %p64, %p65
      %p67 = scmp.ne.s32.totalorder %s58, %s59
      %p68 = scmp.eq.s32.totalorder %s20, 0
      %p69 = por %p67, %p68
      %p70 = scmp.ne.s32.totalorder %s58, %s59
      %p71 = scmp.eq.s32.totalorder %s21, 1
      %p72 = por %p70, %p71
      %p74 = scmp.ne.s32.totalorder %s59, %s73
      %p75 = scmp.eq.s32.totalorder %s21, 0
      %p76 = por %p74, %p75
      %s77 = ssub.s32 %s22, %s34
      %p78 = scmp.eq.s32.totalorder %s77, 0
      %s80 = sadd.s32 %s79, 1
      %s81 = scalar_select %p78, %s79, %s80
      %p84 = pneg %p78
      %p85 = scmp.eq.s32.totalorder %s15, 1
      %p86 = por %p84, %p85
      %p87 = scmp.ne.s32.totalorder %s79, %s82
      %p88 = scmp.eq.s32.totalorder %s15, 0
      %p89 = por %p87, %p88
      %p90 = scmp.ne.s32.totalorder %s79, %s82
      %p91 = scmp.eq.s32.totalorder %s20, 1
      %p92 = por %p90, %p91
      %p93 = scmp.ne.s32.totalorder %s82, %s83
      %p94 = scmp.eq.s32.totalorder %s20, 0
      %p95 = por %p93, %p94
      %p96 = scmp.ne.s32.totalorder %s82, %s83
      %p97 = scmp.eq.s32.totalorder %s21, 1
      %p98 = por %p96, %p97
      %p100 = scmp.ne.s32.totalorder %s83, %s99
      %p101 = scmp.eq.s32.totalorder %s21, 0
      %p102 = por %p100, %p101
      %s103 = ssub.s32 %s23, %s30
      %p104 = scmp.eq.s32.totalorder %s103, 0
      %s106 = sadd.s32 %s105, 1
      %s107 = scalar_select %p104, %s105, %s106
      %p110 = pneg %p104
      %p111 = scmp.eq.s32.totalorder %s15, 1
      %p112 = por %p110, %p111
      %p113 = scmp.ne.s32.totalorder %s105, %s108
      %p114 = scmp.eq.s32.totalorder %s15, 0
      %p115 = por %p113, %p114
      %p116 = scmp.ne.s32.totalorder %s105, %s108
      %p117 = scmp.eq.s32.totalorder %s20, 1
      %p118 = por %p116, %p117
      %p119 = scmp.ne.s32.totalorder %s108, %s109
      %p120 = scmp.eq.s32.totalorder %s20, 0
      %p121 = por %p119, %p120
      %p122 = scmp.ne.s32.totalorder %s108, %s109
      %p123 = scmp.eq.s32.totalorder %s21, 1
      %p124 = por %p122, %p123
      %p126 = scmp.ne.s32.totalorder %s109, %s125
      %p127 = scmp.eq.s32.totalorder %s21, 0
      %p128 = por %p126, %p127
      %s129 = ssub.s32 %s22, %s34
      %s130 = ssub.s32 %s23, %s30
      %s131 = sor.u32 %s129, %s130
      %p132 = scmp.eq.s32.totalorder %s131, 0
      %s134 = sadd.s32 %s133, 1
      %s135 = scalar_select %p132, %s133, %s134
      %p138 = pneg %p132
      %p139 = scmp.eq.s32.totalorder %s15, 1
      %p140 = por %p138, %p139
      %p141 = scmp.ne.s32.totalorder %s133, %s136
      %p142 = scmp.eq.s32.totalorder %s15, 0
      %p143 = por %p141, %p142
      %p144 = scmp.ne.s32.totalorder %s133, %s136
      %p145 = scmp.eq.s32.totalorder %s20, 1
      %p146 = por %p144, %p145
      %p147 = scmp.ne.s32.totalorder %s136, %s137
      %p148 = scmp.eq.s32.totalorder %s20, 0
      %p149 = por %p147, %p148
      %p150 = scmp.ne.s32.totalorder %s136, %s137
      %p151 = scmp.eq.s32.totalorder %s21, 1
      %p152 = por %p150, %p151
      %p154 = scmp.ne.s32.totalorder %s137, %s153
      %p155 = scmp.eq.s32.totalorder %s21, 0
      %p156 = por %p154, %p155
      %p157 = scmp.le.s32.totalorder 1, %s15
      %p158 = scmp.lt.s32.totalorder %s15, 3
      %p159 = pnand %p157, %p158
      %p160 = pneg %p159
      // Predicated region
      $region9: #{tpu_custom_call.1} parent=5 // pred_check
        _
      $region10: #{tpu_custom_call.1} parent=5 // pred_check_branch
        %162 = sbr.rel (%p159) target = $region12
      $region11: #{tpu_custom_call.1} parent=5 // pred_region
        %s163 = ssub.s32 %s15, 1
        // Predicated region
        $region13: #{tpu_custom_call.1} parent=11 // pred_check
          %p164 = pneg %p48
        $region14: #{tpu_custom_call.1} parent=11 // pred_check_branch
          %166 = sbr.rel (%p164) target = $region16
        $region15: #{tpu_custom_call.1} parent=11 // pred_region
          _
        $region16: #{tpu_custom_call.1} parent=11 // pred_fallthru
          _
        // Predicated region
        $region17: #{tpu_custom_call.1} parent=11 // pred_check
          %p167 = pneg %p69
        $region18: #{tpu_custom_call.1} parent=11 // pred_check_branch
          %169 = sbr.rel (%p167) target = $region20
        $region19: #{tpu_custom_call.1} parent=11 // pred_region
          _
        $region20: #{tpu_custom_call.1} parent=11 // pred_fallthru
          _
        // Predicated region
        $region21: #{tpu_custom_call.1} parent=11 // pred_check
          %p170 = pneg %p121
        $region22: #{tpu_custom_call.1} parent=11 // pred_check_branch
          %172 = sbr.rel (%p170) target = $region24
        $region23: #{tpu_custom_call.1} parent=11 // pred_region
          %s173 = smul.u32 2, %s25
          %p174 = scmp.lt.s32.totalorder %s173, 1
          %s175 = scalar_select %p174, %s173, 1
          %s176 = smul.addr %s175, 8
          %s177 = scalar_lea.vmem %s3, %s176
          %s178 = smul.u32 2, %s25
        $region24: #{tpu_custom_call.1} parent=11 // pred_fallthru
          _
      $region12: #{tpu_custom_call.1} parent=5 // pred_fallthru
        _
      %p179 = scmp.lt.s32.totalorder %s15, 2
      // Predicated region
      $region25: #{tpu_custom_call.1} parent=5 // pred_check
        %p180 = pneg %p179
      $region26: #{tpu_custom_call.1} parent=5 // pred_check_branch
        %182 = sbr.rel (%p180) target = $region28
      $region27: #{tpu_custom_call.1} parent=5 // pred_region
        // Predicated region
        $region29: #{tpu_custom_call.1} parent=27 // pred_check
          %p183 = pneg %p89
        $region30: #{tpu_custom_call.1} parent=27 // pred_check_branch
          %185 = sbr.rel (%p183) target = $region32
        $region31: #{tpu_custom_call.1} parent=27 // pred_region
          %s186 = smul.u32 16, %s22
          %p187 = scmp.lt.s32.totalorder %s186, 31
          %s188 = scalar_select %p187, %s186, 31
          %s189 = smul.addr %s188, 8
          %s190 = scalar_lea.vmem %s2, %s189
          %s191 = smul.u32 16, %s22
        $region32: #{tpu_custom_call.1} parent=27 // pred_fallthru
          _
      $region28: #{tpu_custom_call.1} parent=5 // pred_fallthru
        _
      %p192 = scmp.le.s32.totalorder 1, %s15
      %p193 = scmp.lt.s32.totalorder %s15, 3
      %p194 = pnand %p192, %p193
      %p195 = pneg %p194
      // Predicated region
      $region33: #{tpu_custom_call.1} parent=5 // pred_check
        _
      $region34: #{tpu_custom_call.1} parent=5 // pred_check_branch
        %197 = sbr.rel (%p194) target = $region36
      $region35: #{tpu_custom_call.1} parent=5 // pred_region
        %s198 = ssub.s32 %s15, 1
        %p199 = pneg %p48
        %p200 = pneg %p45
        %p201 = pneg %p69
        %p202 = pneg %p66
        %s203 = smul.u32 16, %s24
        %p204 = scmp.lt.s32.totalorder %s203, 31
        %s205 = scalar_select %p204, %s203, 31
        %s206 = smul.addr %s205, 8
        %s207 = scalar_lea.vmem %s2, %s206
        %p208 = pneg %p95
        %p209 = pneg %p92
        %s210 = smul.u32 2, %s25
        %p211 = scmp.lt.s32.totalorder %s210, 1
        %s212 = scalar_select %p211, %s210, 1
        %s213 = smul.addr %s212, 8
        %s214 = scalar_lea.vmem %s3, %s213
        %p215 = pneg %p121
        %p216 = pneg %p118
        %p217 = pneg %p149
        %p218 = pneg %p146
        %s219 = sand.u32 %s136, 1
        %s220 = scalar_lea.sflag [#allocation5], %s219
        %s221 = sand.u32 %s136, 1
        %s222 = smul.addr %s221, 256
        %s223 = scalar_lea.vmem [#allocation4], %s222
        %s224 = smul.u32 16, %s24
        %p225 = scmp.lt.s32.totalorder %s224, 31
        %s226 = scalar_select %p225, %s224, 31
        %s227 = smul.addr %s226, 8
        %s228 = scalar_lea.vmem %s2, %s227
        %s229 = smul.u32 16, %s24
        %s230 = smul.u32 2, %s25
        %p231 = scmp.lt.s32.totalorder %s230, 1
        %s232 = scalar_select %p231, %s230, 1
        %s233 = smul.addr %s232, 8
        %s234 = scalar_lea.vmem %s3, %s233
        %s235 = smul.u32 2, %s25
        %s236 = smul.u32 16, %s24
        %s237 = smul.u32 2, %s25
        %v238 = vld [vmem:[%s228] sm:$0xff]
        %v239 = vld [vmem:[%s228 + $0x8] sm:$0xff]
        %v240 = vld [vmem:[%s228 + $0x10] sm:$0xff]
        %v241 = vld [vmem:[%s228 + $0x18] sm:$0xff]
        %v242 = vld [vmem:[%s228 + $0x20] sm:$0xff]
        %v243 = vld [vmem:[%s228 + $0x28] sm:$0xff]
        %v244 = vld [vmem:[%s228 + $0x30] sm:$0xff]
        %v245 = vld [vmem:[%s228 + $0x38] sm:$0xff]
        %v246 = vld [vmem:[%s228 + $0x40] sm:$0xff]
        %v247 = vld [vmem:[%s228 + $0x48] sm:$0xff]
        %v248 = vld [vmem:[%s228 + $0x50] sm:$0xff]
        %v249 = vld [vmem:[%s228 + $0x58] sm:$0xff]
        %v250 = vld [vmem:[%s228 + $0x60] sm:$0xff]
        %v251 = vld [vmem:[%s228 + $0x68] sm:$0xff]
        %v252 = vld [vmem:[%s228 + $0x70] sm:$0xff]
        %v253 = vld [vmem:[%s228 + $0x78] sm:$0xff]
        %v254 = vld [vmem:[%s234] sm:$0xff]
        %v255 = vld [vmem:[%s234 + $0x8] sm:$0xff]
        %v256 = vld [vmem:[%s234 + $0x10] sm:$0x3]
        %v257 = vld [vmem:[%s234 + $0x18] sm:$0x3]
        %vm258 = vcmask 80896
        %v260 = vsel %vm258, %v238, 0
        %v263 = vsel %vm258, %v239, 0
        %v266 = vsel %vm258, %v240, 0
        %v269 = vsel %vm258, %v241, 0
        %v272 = vsel %vm258, %v242, 0
        %v275 = vsel %vm258, %v243, 0
        %v278 = vsel %vm258, %v244, 0
        %v281 = vsel %vm258, %v245, 0
        %v284 = vsel %vm258, %v246, 0
        %v287 = vsel %vm258, %v247, 0
        %v290 = vsel %vm258, %v248, 0
        %v293 = vsel %vm258, %v249, 0
        %v296 = vsel %vm258, %v250, 0
        %v299 = vsel %vm258, %v251, 0
        %v302 = vsel %vm258, %v252, 0
        %v305 = vsel %vm258, %v253, 0
        %vm307 = vcmask 1041408
        %v309 = vsel %vm307, %v256, 0
        %v312 = vsel %vm307, %v257, 0
        %314 = vmatprep.subr.mxu0 %v255
        %315 = vmatpush1.msra.mxu0 %v254
        %316 = vmatprep.subr.mxu0 %v312
        %317 = vmatpush1.msra.mxu0 %v309
        %318 = vmatprep.subr.mxu0 0.0
        %319 = vmatpush1.msra.mxu0 0.0
        %320 = vmatprep.subr.mxu0 0.0
        %321 = vmatpush1.msra.mxu0 0.0
        %322 = vmatprep.subr.mxu0 0.0
        %323 = vmatpush1.msra.mxu0 0.0
        %324 = vmatprep.subr.mxu0 0.0
        %325 = vmatpush1.msra.mxu0 0.0
        %326 = vmatprep.subr.mxu0 0.0
        %327 = vmatpush1.msra.mxu0 0.0
        %328 = vmatprep.subr.mxu0 0.0
        %329 = vmatpush1.msra.mxu0 0.0
        %330 = vmatprep.subr.mxu0 0.0
        %331 = vmatpush1.msra.mxu0 0.0
        %332 = vmatprep.subr.mxu0 0.0
        %333 = vmatpush1.msra.mxu0 0.0
        %334 = vmatprep.subr.mxu0 0.0
        %335 = vmatpush1.msra.mxu0 0.0
        %336 = vmatprep.subr.mxu0 0.0
        %337 = vmatpush1.msra.mxu0 0.0
        %338 = vmatprep.subr.mxu0 0.0
        %339 = vmatpush1.msra.mxu0 0.0
        %340 = vmatprep.subr.mxu0 0.0
        %341 = vmatpush1.msra.mxu0 0.0
        %342 = vmatprep.subr.mxu0 0.0
        %343 = vmatpush1.msra.mxu0 0.0
        %344 = vmatprep.subr.mxu0 0.0
        %345 = vmatpush1.msra.mxu0 0.0
        %346 = vmatprep.subr.mxu0 0.0
        %347 = vmatpush1.msra.mxu0 0.0
        %348 = vmatprep.subr.mxu0 0.0
        %349 = vmatpush1.msra.mxu0 0.0
        %350 = vmatprep.subr.mxu0 0.0
        %351 = vmatpush1.msra.mxu0 0.0
        %352 = vmatprep.subr.mxu0 0.0
        %353 = vmatpush1.msra.mxu0 0.0
        %354 = vmatprep.subr.mxu0 0.0
        %355 = vmatpush1.msra.mxu0 0.0
        %356 = vmatprep.subr.mxu0 0.0
        %357 = vmatpush1.msra.mxu0 0.0
        %358 = vmatprep.subr.mxu0 0.0
        %359 = vmatpush1.msra.mxu0 0.0
        %360 = vmatprep.subr.mxu0 0.0
        %361 = vmatpush1.msra.mxu0 0.0
        %362 = vmatprep.subr.mxu0 0.0
        %363 = vmatpush1.msra.mxu0 0.0
        %364 = vmatprep.subr.mxu0 0.0
        %365 = vmatpush1.msra.mxu0 0.0
        %366 = vmatprep.subr.mxu0 0.0
        %367 = vmatpush1.msra.mxu0 0.0
        %368 = vmatprep.subr.mxu0 0.0
        %369 = vmatpush1.msra.mxu0 0.0
        %370 = vmatprep.subr.mxu0 0.0
        %371 = vmatpush1.msra.mxu0 0.0
        %372 = vmatprep.subr.mxu0 0.0
        %373 = vmatpush1.msra.mxu0 0.0
        %374 = vmatprep.subr.mxu0 0.0
        %375 = vmatpush1.msra.mxu0 0.0
        %376 = vmatprep.subr.mxu0 0.0
        %377 = vmatpush1.msra.mxu0 0.0
        %378 = vmatprep.mubr.f32.mxu0 0.0
        %379 = vmatmul.mubr.f32.gmra.mrb[0].mxu0 %v260
        %v380 = vpop.f32.mrb[0].mxu0
        %v381 = vadd.f32 0.0, %v380
        %v382 = vpop.f32.mrb[0].mxu0
        %v383 = vadd.f32 0.0, %v382
        %384 = vmatprep.mubr.f32.mxu0 0.0
        %385 = vmatmul.mubr.f32.gmra.mrb[0].mxu0 %v263
        %v386 = vpop.f32.mrb[0].mxu0
        %v387 = vadd.f32 0.0, %v386
        %v388 = vpop.f32.mrb[0].mxu0
        %v389 = vadd.f32 0.0, %v388
        %390 = vmatprep.mubr.f32.mxu0 0.0
        %391 = vmatmul.mubr.f32.gmra.mrb[0].mxu0 %v266
        %v392 = vpop.f32.mrb[0].mxu0
        %v393 = vadd.f32 0.0, %v392
        %v394 = vpop.f32.mrb[0].mxu0
        %v395 = vadd.f32 0.0, %v394
        %396 = vmatprep.mubr.f32.mxu0 0.0
        %397 = vmatmul.mubr.f32.gmra.mrb[0].mxu0 %v269
        %v398 = vpop.f32.mrb[0].mxu0
        %v399 = vadd.f32 0.0, %v398
        %v400 = vpop.f32.mrb[0].mxu0
        %v401 = vadd.f32 0.0, %v400
        %402 = vmatprep.mubr.f32.mxu0 0.0
        %403 = vmatmul.mubr.f32.gmra.mrb[0].mxu0 %v272
        %v404 = vpop.f32.mrb[0].mxu0
        %v405 = vadd.f32 0.0, %v404
        %v406 = vpop.f32.mrb[0].mxu0
        %v407 = vadd.f32 0.0, %v406
        %408 = vmatprep.mubr.f32.mxu0 0.0
        %409 = vmatmul.mubr.f32.gmra.mrb[0].mxu0 %v275
        %v410 = vpop.f32.mrb[0].mxu0
        %v411 = vadd.f32 0.0, %v410
        %v412 = vpop.f32.mrb[0].mxu0
        %v413 = vadd.f32 0.0, %v412
        %414 = vmatprep.mubr.f32.mxu0 0.0
        %415 = vmatmul.mubr.f32.gmra.mrb[0].mxu0 %v278
        %v416 = vpop.f32.mrb[0].mxu0
        %v417 = vadd.f32 0.0, %v416
        %v418 = vpop.f32.mrb[0].mxu0
        %v419 = vadd.f32 0.0, %v418
        %420 = vmatprep.mubr.f32.mxu0 0.0
        %421 = vmatmul.mubr.f32.gmra.mrb[0].mxu0 %v281
        %v422 = vpop.f32.mrb[0].mxu0
        %v423 = vadd.f32 0.0, %v422
        %v424 = vpop.f32.mrb[0].mxu0
        %v425 = vadd.f32 0.0, %v424
        %426 = vmatprep.mubr.f32.mxu0 0.0
        %427 = vmatmul.mubr.f32.gmra.mrb[0].mxu0 %v284
        %v428 = vpop.f32.mrb[0].mxu0
        %v429 = vadd.f32 0.0, %v428
        %v430 = vpop.f32.mrb[0].mxu0
        %v431 = vadd.f32 0.0, %v430
        %432 = vmatprep.mubr.f32.mxu0 0.0
        %433 = vmatmul.mubr.f32.gmra.mrb[0].mxu0 %v287
        %v434 = vpop.f32.mrb[0].mxu0
        %v435 = vadd.f32 0.0, %v434
        %v436 = vpop.f32.mrb[0].mxu0
        %v437 = vadd.f32 0.0, %v436
        %438 = vmatprep.mubr.f32.mxu0 0.0
        %439 = vmatmul.mubr.f32.gmra.mrb[0].mxu0 %v290
        %v440 = vpop.f32.mrb[0].mxu0
        %v441 = vadd.f32 0.0, %v440
        %v442 = vpop.f32.mrb[0].mxu0
        %v443 = vadd.f32 0.0, %v442
        %444 = vmatprep.mubr.f32.mxu0 0.0
        %445 = vmatmul.mubr.f32.gmra.mrb[0].mxu0 %v293
        %v446 = vpop.f32.mrb[0].mxu0
        %v447 = vadd.f32 0.0, %v446
        %v448 = vpop.f32.mrb[0].mxu0
        %v449 = vadd.f32 0.0, %v448
        %450 = vmatprep.mubr.f32.mxu0 0.0
        %451 = vmatmul.mubr.f32.gmra.mrb[0].mxu0 %v296
        %v452 = vpop.f32.mrb[0].mxu0
        %v453 = vadd.f32 0.0, %v452
        %v454 = vpop.f32.mrb[0].mxu0
        %v455 = vadd.f32 0.0, %v454
        %456 = vmatprep.mubr.f32.mxu0 0.0
        %457 = vmatmul.mubr.f32.gmra.mrb[0].mxu0 %v299
        %v458 = vpop.f32.mrb[0].mxu0
        %v459 = vadd.f32 0.0, %v458
        %v460 = vpop.f32.mrb[0].mxu0
        %v461 = vadd.f32 0.0, %v460
        %462 = vmatprep.mubr.f32.mxu0 0.0
        %463 = vmatmul.mubr.f32.gmra.mrb[0].mxu0 %v302
        %v464 = vpop.f32.mrb[0].mxu0
        %v465 = vadd.f32 0.0, %v464
        %v466 = vpop.f32.mrb[0].mxu0
        %v467 = vadd.f32 0.0, %v466
        %468 = vmatprep.mubr.f32.mxu0 0.0
        %469 = vmatmul.mubr.f32.gmra.mrb[0].mxu0 %v305
        %v470 = vpop.f32.mrb[0].mxu0
        %v471 = vadd.f32 0.0, %v470
        %v472 = vpop.f32.mrb[0].mxu0
        %v473 = vadd.f32 0.0, %v472
        %474 = vdwg.mxu0
        %s475 = sld [smem:[#allocation2]]
        %v476 = vstv %s475
        %v477 = vmin.f32 %v381, %v476
        %v478 = vmin.f32 %v383, %v476
        %v479 = vmin.f32 %v387, %v476
        %v480 = vmin.f32 %v389, %v476
        %v481 = vmin.f32 %v393, %v476
        %v482 = vmin.f32 %v395, %v476
        %v483 = vmin.f32 %v399, %v476
        %v484 = vmin.f32 %v401, %v476
        %v485 = vmin.f32 %v405, %v476
        %v486 = vmin.f32 %v407, %v476
        %v487 = vmin.f32 %v411, %v476
        %v488 = vmin.f32 %v413, %v476
        %v489 = vmin.f32 %v417, %v476
        %v490 = vmin.f32 %v419, %v476
        %v491 = vmin.f32 %v423, %v476
        %v492 = vmin.f32 %v425, %v476
        %v493 = vmin.f32 %v429, %v476
        %v494 = vmin.f32 %v431, %v476
        %v495 = vmin.f32 %v435, %v476
        %v496 = vmin.f32 %v437, %v476
        %v497 = vmin.f32 %v441, %v476
        %v498 = vmin.f32 %v443, %v476
        %v499 = vmin.f32 %v447, %v476
        %v500 = vmin.f32 %v449, %v476
        %v501 = vmin.f32 %v453, %v476
        %v502 = vmin.f32 %v455, %v476
        %v503 = vmin.f32 %v459, %v476
        %v504 = vmin.f32 %v461, %v476
        %v505 = vmin.f32 %v465, %v476
        %v506 = vmin.f32 %v467, %v476
        %v507 = vmin.f32 %v471, %v476
        %v508 = vmin.f32 %v473, %v476
        %v509 = vmul.f32 %v477, 1.442695
        %v510 = vpow.pop %v509
        %v511 = vmul.f32 %v478, 1.442695
        %v512 = vpow.pop %v511
        %v513 = vmul.f32 %v479, 1.442695
        %v514 = vpow.pop %v513
        %v515 = vmul.f32 %v480, 1.442695
        %v516 = vpow.pop %v515
        %v517 = vmul.f32 %v481, 1.442695
        %v518 = vpow.pop %v517
        %v519 = vmul.f32 %v482, 1.442695
        %v520 = vpow.pop %v519
        %v521 = vmul.f32 %v483, 1.442695
        %v522 = vpow.pop %v521
        %v523 = vmul.f32 %v484, 1.442695
        %v524 = vpow.pop %v523
        %v525 = vmul.f32 %v485, 1.442695
        %v526 = vpow.pop %v525
        %v527 = vmul.f32 %v486, 1.442695
        %v528 = vpow.pop %v527
        %v529 = vmul.f32 %v487, 1.442695
        %v530 = vpow.pop %v529
        %v531 = vmul.f32 %v488, 1.442695
        %v532 = vpow.pop %v531
        %v533 = vmul.f32 %v489, 1.442695
        %v534 = vpow.pop %v533
        %v535 = vmul.f32 %v490, 1.442695
        %v536 = vpow.pop %v535
        %v537 = vmul.f32 %v491, 1.442695
        %v538 = vpow.pop %v537
        %v539 = vmul.f32 %v492, 1.442695
        %v540 = vpow.pop %v539
        %v541 = vmul.f32 %v493, 1.442695
        %v542 = vpow.pop %v541
        %v543 = vmul.f32 %v494, 1.442695
        %v544 = vpow.pop %v543
        %v545 = vmul.f32 %v495, 1.442695
        %v546 = vpow.pop %v545
        %v547 = vmul.f32 %v496, 1.442695
        %v548 = vpow.pop %v547
        %v549 = vmul.f32 %v497, 1.442695
        %v550 = vpow.pop %v549
        %v551 = vmul.f32 %v498, 1.442695
        %v552 = vpow.pop %v551
        %v553 = vmul.f32 %v499, 1.442695
        %v554 = vpow.pop %v553
        %v555 = vmul.f32 %v500, 1.442695
        %v556 = vpow.pop %v555
        %v557 = vmul.f32 %v501, 1.442695
        %v558 = vpow.pop %v557
        %v559 = vmul.f32 %v502, 1.442695
        %v560 = vpow.pop %v559
        %v561 = vmul.f32 %v503, 1.442695
        %v562 = vpow.pop %v561
        %v563 = vmul.f32 %v504, 1.442695
        %v564 = vpow.pop %v563
        %v565 = vmul.f32 %v505, 1.442695
        %v566 = vpow.pop %v565
        %v567 = vmul.f32 %v506, 1.442695
        %v568 = vpow.pop %v567
        %v569 = vmul.f32 %v507, 1.442695
        %v570 = vpow.pop %v569
        %v571 = vmul.f32 %v508, 1.442695
        %v572 = vpow.pop %v571
        %v573 = vlaneseq
        %v574 = vshrl.u32 %v573, 7
        %v575 = vadd.s32 %v574, 8
        %v576 = vadd.s32 %v574, 16
        %v577 = vadd.s32 %v574, 24
        %v578 = vadd.s32 %v574, 32
        %v579 = vadd.s32 %v574, 40
        %v580 = vadd.s32 %v574, 48
        %v581 = vadd.s32 %v574, 56
        %v582 = vadd.s32 %v574, 64
        %v583 = vadd.s32 %v574, 72
        %v584 = vadd.s32 %v574, 80
        %v585 = vadd.s32 %v574, 88
        %v586 = vadd.s32 %v574, 96
        %v587 = vadd.s32 %v574, 104
        %v588 = vadd.s32 %v574, 112
        %v589 = vadd.s32 %v574, 120
        %s590 = smul.u32 %s24, 128
        %v591 = vstv %s590
        %v592 = vadd.s32 %v574, %v591
        %v593 = vadd.s32 %v575, %v591
        %v594 = vadd.s32 %v576, %v591
        %v595 = vadd.s32 %v577, %v591
        %v596 = vadd.s32 %v578, %v591
        %v597 = vadd.s32 %v579, %v591
        %v598 = vadd.s32 %v580, %v591
        %v599 = vadd.s32 %v581, %v591
        %v600 = vadd.s32 %v582, %v591
        %v601 = vadd.s32 %v583, %v591
        %v602 = vadd.s32 %v584, %v591
        %v603 = vadd.s32 %v585, %v591
        %v604 = vadd.s32 %v586, %v591
        %v605 = vadd.s32 %v587, %v591
        %v606 = vadd.s32 %v588, %v591
        %v607 = vadd.s32 %v589, %v591
        %v608 = vlaneseq
        %v609 = vand.u32 %v608, 127
        %v610 = vadd.s32 %v609, 128
        %s611 = smul.u32 %s25, 256
        %v612 = vstv %s611
        %v613 = vadd.s32 %v609, %v612
        %v614 = vadd.s32 %v610, %v612
        %vm615 = vcmp.eq.s32.totalorder %v592, %v613
        %vm616 = vcmp.eq.s32.totalorder %v592, %v614
        %vm617 = vcmp.eq.s32.totalorder %v593, %v613
        %vm618 = vcmp.eq.s32.totalorder %v593, %v614
        %vm619 = vcmp.eq.s32.totalorder %v594, %v613
        %vm620 = vcmp.eq.s32.totalorder %v594, %v614
        %vm621 = vcmp.eq.s32.totalorder %v595, %v613
        %vm622 = vcmp.eq.s32.totalorder %v595, %v614
        %vm623 = vcmp.eq.s32.totalorder %v596, %v613
        %vm624 = vcmp.eq.s32.totalorder %v596, %v614
        %vm625 = vcmp.eq.s32.totalorder %v597, %v613
        %vm626 = vcmp.eq.s32.totalorder %v597, %v614
        %vm627 = vcmp.eq.s32.totalorder %v598, %v613
        %vm628 = vcmp.eq.s32.totalorder %v598, %v614
        %vm629 = vcmp.eq.s32.totalorder %v599, %v613
        %vm630 = vcmp.eq.s32.totalorder %v599, %v614
        %vm631 = vcmp.eq.s32.totalorder %v600, %v613
        %vm632 = vcmp.eq.s32.totalorder %v600, %v614
        %vm633 = vcmp.eq.s32.totalorder %v601, %v613
        %vm634 = vcmp.eq.s32.totalorder %v601, %v614
        %vm635 = vcmp.eq.s32.totalorder %v602, %v613
        %vm636 = vcmp.eq.s32.totalorder %v602, %v614
        %vm637 = vcmp.eq.s32.totalorder %v603, %v613
        %vm638 = vcmp.eq.s32.totalorder %v603, %v614
        %vm639 = vcmp.eq.s32.totalorder %v604, %v613
        %vm640 = vcmp.eq.s32.totalorder %v604, %v614
        %vm641 = vcmp.eq.s32.totalorder %v605, %v613
        %vm642 = vcmp.eq.s32.totalorder %v605, %v614
        %vm643 = vcmp.eq.s32.totalorder %v606, %v613
        %vm644 = vcmp.eq.s32.totalorder %v606, %v614
        %vm645 = vcmp.eq.s32.totalorder %v607, %v613
        %vm646 = vcmp.eq.s32.totalorder %v607, %v614
        %s647 = sld [smem:[#allocation3]]
        %v648 = vstv %s647
        %v649 = vsel %vm615, %v648, 0.0
        %v650 = vsel %vm616, %v648, 0.0
        %v651 = vsel %vm617, %v648, 0.0
        %v652 = vsel %vm618, %v648, 0.0
        %v653 = vsel %vm619, %v648, 0.0
        %v654 = vsel %vm620, %v648, 0.0
        %v655 = vsel %vm621, %v648, 0.0
        %v656 = vsel %vm622, %v648, 0.0
        %v657 = vsel %vm623, %v648, 0.0
        %v658 = vsel %vm624, %v648, 0.0
        %v659 = vsel %vm625, %v648, 0.0
        %v660 = vsel %vm626, %v648, 0.0
        %v661 = vsel %vm627, %v648, 0.0
        %v662 = vsel %vm628, %v648, 0.0
        %v663 = vsel %vm629, %v648, 0.0
        %v664 = vsel %vm630, %v648, 0.0
        %v665 = vsel %vm631, %v648, 0.0
        %v666 = vsel %vm632, %v648, 0.0
        %v667 = vsel %vm633, %v648, 0.0
        %v668 = vsel %vm634, %v648, 0.0
        %v669 = vsel %vm635, %v648, 0.0
        %v670 = vsel %vm636, %v648, 0.0
        %v671 = vsel %vm637, %v648, 0.0
        %v672 = vsel %vm638, %v648, 0.0
        %v673 = vsel %vm639, %v648, 0.0
        %v674 = vsel %vm640, %v648, 0.0
        %v675 = vsel %vm641, %v648, 0.0
        %v676 = vsel %vm642, %v648, 0.0
        %v677 = vsel %vm643, %v648, 0.0
        %v678 = vsel %vm644, %v648, 0.0
        %v679 = vsel %vm645, %v648, 0.0
        %v680 = vsel %vm646, %v648, 0.0
        %v681 = vadd.f32 %v510, %v649
        %v682 = vadd.f32 %v512, %v650
        %v683 = vadd.f32 %v514, %v651
        %v684 = vadd.f32 %v516, %v652
        %v685 = vadd.f32 %v518, %v653
        %v686 = vadd.f32 %v520, %v654
        %v687 = vadd.f32 %v522, %v655
        %v688 = vadd.f32 %v524, %v656
        %v689 = vadd.f32 %v526, %v657
        %v690 = vadd.f32 %v528, %v658
        %v691 = vadd.f32 %v530, %v659
        %v692 = vadd.f32 %v532, %v660
        %v693 = vadd.f32 %v534, %v661
        %v694 = vadd.f32 %v536, %v662
        %v695 = vadd.f32 %v538, %v663
        %v696 = vadd.f32 %v540, %v664
        %v697 = vadd.f32 %v542, %v665
        %v698 = vadd.f32 %v544, %v666
        %v699 = vadd.f32 %v546, %v667
        %v700 = vadd.f32 %v548, %v668
        %v701 = vadd.f32 %v550, %v669
        %v702 = vadd.f32 %v552, %v670
        %v703 = vadd.f32 %v554, %v671
        %v704 = vadd.f32 %v556, %v672
        %v705 = vadd.f32 %v558, %v673
        %v706 = vadd.f32 %v560, %v674
        %v707 = vadd.f32 %v562, %v675
        %v708 = vadd.f32 %v564, %v676
        %v709 = vadd.f32 %v566, %v677
        %v710 = vadd.f32 %v568, %v678
        %v711 = vadd.f32 %v570, %v679
        %v712 = vadd.f32 %v572, %v680
        %713 = vst [vmem:[%s223] sm:$0xff] %v681
        %714 = vst [vmem:[%s223 + $0x8] sm:$0xff] %v682
        %715 = vst [vmem:[%s223 + $0x10] sm:$0xff] %v683
        %716 = vst [vmem:[%s223 + $0x18] sm:$0xff] %v684
        %717 = vst [vmem:[%s223 + $0x20] sm:$0xff] %v685
        %718 = vst [vmem:[%s223 + $0x28] sm:$0xff] %v686
        %719 = vst [vmem:[%s223 + $0x30] sm:$0xff] %v687
        %720 = vst [vmem:[%s223 + $0x38] sm:$0xff] %v688
        %721 = vst [vmem:[%s223 + $0x40] sm:$0xff] %v689
        %722 = vst [vmem:[%s223 + $0x48] sm:$0xff] %v690
        %723 = vst [vmem:[%s223 + $0x50] sm:$0xff] %v691
        %724 = vst [vmem:[%s223 + $0x58] sm:$0xff] %v692
        %725 = vst [vmem:[%s223 + $0x60] sm:$0xff] %v693
        %726 = vst [vmem:[%s223 + $0x68] sm:$0xff] %v694
        %727 = vst [vmem:[%s223 + $0x70] sm:$0xff] %v695
        %728 = vst [vmem:[%s223 + $0x78] sm:$0xff] %v696
        %729 = vst [vmem:[%s223 + $0x80] sm:$0xff] %v697
        %730 = vst [vmem:[%s223 + $0x88] sm:$0xff] %v698
        %731 = vst [vmem:[%s223 + $0x90] sm:$0xff] %v699
        %732 = vst [vmem:[%s223 + $0x98] sm:$0xff] %v700
        %733 = vst [vmem:[%s223 + $0xa0] sm:$0xff] %v701
        %734 = vst [vmem:[%s223 + $0xa8] sm:$0xff] %v702
        %735 = vst [vmem:[%s223 + $0xb0] sm:$0xff] %v703
        %736 = vst [vmem:[%s223 + $0xb8] sm:$0xff] %v704
        %737 = vst [vmem:[%s223 + $0xc0] sm:$0xff] %v705
        %738 = vst [vmem:[%s223 + $0xc8] sm:$0xff] %v706
        %739 = vst [vmem:[%s223 + $0xd0] sm:$0xff] %v707
        %740 = vst [vmem:[%s223 + $0xd8] sm:$0xff] %v708
        %741 = vst [vmem:[%s223 + $0xe0] sm:$0xff] %v709
        %742 = vst [vmem:[%s223 + $0xe8] sm:$0xff] %v710
        %743 = vst [vmem:[%s223 + $0xf0] sm:$0xff] %v711
        %744 = vst [vmem:[%s223 + $0xf8] sm:$0xff] %v712
        %s745 = sand.u32 %s136, 1
        %s746 = scalar_lea.sflag [#allocation5], %s745
        %s747 = sand.u32 %s136, 1
        %s748 = smul.addr %s747, 256
        %s749 = scalar_lea.vmem [#allocation4], %s748
        // Predicated region
        $region37: #{tpu_custom_call.1} parent=35 // pred_check
          %p750 = pneg %p146
        $region38: #{tpu_custom_call.1} parent=35 // pred_check_branch
          %752 = sbr.rel (%p750) target = $region40
        $region39: #{tpu_custom_call.1} parent=35 // pred_region
          %s753 = smul.u32 16, %s24
          %s754 = smul.u32 2, %s25
          %s756 = ssub.s32 4096, 4096
          %757 = vsyncadd %s746, %s756
          %s758 = smul.addr %s753, 2
          %s759 = sadd.s32 %s754, %s758
          %s760 = smul.addr %s759, 128
          %s761 = scalar_lea.hbm %s4, %s760
          %s762 = sshll.u32 %s749, 4
          %s763 = int_to_ptr.vmem [resolvable:$true] %s762
          %768 = dma.vmem_to_hbm [thread:$0]  %s763, 4096, %s761, %s746, 256, 256, 16
        $region40: #{tpu_custom_call.1} parent=35 // pred_fallthru
          _
      $region36: #{tpu_custom_call.1} parent=5 // pred_fallthru
        _
      %p769 = scmp.le.s32.totalorder 2, %s15
      // Predicated region
      $region41: #{tpu_custom_call.1} parent=5 // pred_check
        %p770 = pneg %p769
      $region42: #{tpu_custom_call.1} parent=5 // pred_check_branch
        %772 = sbr.rel (%p770) target = $region44
      $region43: #{tpu_custom_call.1} parent=5 // pred_region
        %s773 = ssub.s32 %s15, 2
        // Predicated region
        $region45: #{tpu_custom_call.1} parent=43 // pred_check
          %p774 = pneg %p152
        $region46: #{tpu_custom_call.1} parent=43 // pred_check_branch
          %776 = sbr.rel (%p774) target = $region48
        $region47: #{tpu_custom_call.1} parent=43 // pred_region
          %s777 = sand.u32 %s137, 1
          %s778 = scalar_lea.sflag [#allocation5], %s777
          %s779 = sand.u32 %s137, 1
          %s780 = smul.addr %s779, 256
          %s781 = scalar_lea.vmem [#allocation4], %s780
          %782 = dma.done %s778, 4096
        $region48: #{tpu_custom_call.1} parent=43 // pred_fallthru
          _
      $region44: #{tpu_custom_call.1} parent=5 // pred_fallthru
        _
    $region6: #{tpu_custom_call.1} parent=1 // loop_footer
      %s19 = sadd.s32 1, %s15
    $region7: #{tpu_custom_call.1} parent=1 // loop_footer_branch
      %14 = sbr.rel target = $region3
    $region8: #{tpu_custom_call.1} parent=1 // loop_exit
      _
    %783 = vsyncpa [#allocation5], 1
    %s784 = scalar_lea.sflag [#allocation5], 1
    %785 = vsyncpa %s784, 1

</llo_original>
